<compile_context>
chip_gen: v7x
topology: tpu7x:2x2x1
jax: 0.10.0
libtpu: 0.0.40
codegen_flags: <defaults>
</compile_context>

<pallas_src>
import functools

import jax
import jax.numpy as jnp
from jax.experimental import pallas as pl
from jax.experimental.pallas import tpu as pltpu


def _overfit_kernel(x_ref, w_ref, bias_ref, o_ref, acc_ref, *, inv_hw):
    """One (batch-tile, HW-chunk) step of: logits = GAP(x) @ W + (b + prime).

    x_ref   : (TILE_N, C, TILE_HW) bf16  HW chunk on the lane axis
    w_ref   : (C, K_pad)           bf16  frozen classifier weight (resident)
    bias_ref: (1, K_pad)           f32   classifier bias + learnable `prime`
    o_ref   : (TILE_N, K_pad)      f32   logits (written on the last HW step)
    acc_ref : (TILE_N, C)          f32   spatial-sum accumulator (scratch)
    """
    hw_idx = pl.program_id(1)

    @pl.when(hw_idx == 0)
    def _():
        acc_ref[...] = jnp.zeros_like(acc_ref)

    # Partial spatial sum for this HW chunk, accumulated in f32.
    acc_ref[...] += jnp.sum(x_ref[...].astype(jnp.float32), axis=-1)

    @pl.when(hw_idx == pl.num_programs(1) - 1)
    def _():
        feats = acc_ref[...] * inv_hw                          # (TILE_N, C) f32
        logits = jnp.dot(feats.astype(w_ref.dtype), w_ref[...],
                         preferred_element_type=jnp.float32)   # (TILE_N, K_pad)
        o_ref[...] = logits + bias_ref[...]


def pack_classifier(w, b, *, k_pad=None):
    """One-time packing of the frozen classifier head (cache the result).

    w: (C, K) f32 -> (C, K_pad) bf16;  b: (K,) f32 -> (1, K_pad) f32.
    """
    c, k = w.shape
    if k_pad is None:
        k_pad = pl.cdiv(k, 128) * 128
    w_p = jnp.zeros((c, k_pad), jnp.bfloat16).at[:, :k].set(w.astype(jnp.bfloat16))
    b_p = jnp.zeros((1, k_pad), jnp.float32).at[0, :k].set(b.astype(jnp.float32))
    return w_p, b_p


def _vmem_limit_bytes():
    # ~56 MiB on v7x (64 MiB physical), ~100 MiB on v5e/v6e (128 MiB physical).
    try:
        cap = int(pltpu.get_tpu_info().vmem_capacity_bytes)
    except Exception:
        cap = 64 * 1024 * 1024
    return max(32 * 1024 * 1024, min(cap - 8 * 1024 * 1024, 100 * 1024 * 1024))


def _derive_tiles(n, c, hw, itemsize, budget_bytes, *, tile_hw=None):
    # HW chunk lives on the lane axis: must be a multiple of 128 or full HW.
    if tile_hw is None:
        tile_hw = hw
        if hw % 128 == 0:
            for cand in (512, 384, 256, 128):
                if hw % cand == 0:
                    tile_hw = min(hw, cand)
                    break
    assert hw % tile_hw == 0, (hw, tile_hw)

    # Half the VMEM budget for the double-buffered x stream; the rest covers
    # the resident weight/bias, the output block and scratch.
    x_budget = budget_bytes // 2
    max_tile_n = max(1, x_budget // (2 * c * tile_hw * itemsize))
    if n <= max_tile_n:
        tile_n = n                    # single full-extent batch tile, no pad
    else:
        tile_n = max(8, (min(max_tile_n, 256) // 8) * 8)
    return tile_n, tile_hw


def overfit_forward(x, w_p, b_p, prime, *, tile_hw=None):
    """x: (N, C, H, W); w_p: (C, K_pad) bf16; b_p: (1, K_pad) f32; prime: (K,).

    Returns (N, K) f32 logits = GAP(x) @ W + b + prime.
    """
    n, c, h, wd = x.shape
    hw = h * wd
    k = prime.shape[0]
    k_pad = w_p.shape[1]

    # Natural (N, C, HW) layout: pure reshape, no transpose / extra traffic.
    x_r = x.reshape(n, c, hw)
    if x_r.dtype == jnp.float32:
        # TODO(synk): in the real model the backbone would emit bf16 features
        # directly; cast at the boundary so the kernel streams bf16.
        x_r = x_r.astype(jnp.bfloat16)

    vmem_limit = _vmem_limit_bytes()
    tile_n, tile_hw = _derive_tiles(n, c, hw, x_r.dtype.itemsize, vmem_limit,
                                    tile_hw=tile_hw)
    n_pad = pl.cdiv(n, tile_n) * tile_n
    if n_pad != n:
        x_r = jnp.pad(x_r, ((0, n_pad - n), (0, 0), (0, 0)))

    # Fold the tiny learnable `prime` into the cached classifier bias.
    bias = b_p.at[0, :k].add(prime.astype(jnp.float32))

    grid = (n_pad // tile_n, hw // tile_hw)
    kernel = functools.partial(_overfit_kernel, inv_hw=float(1.0 / hw))

    out = pl.pallas_call(
        kernel,
        out_shape=jax.ShapeDtypeStruct((n_pad, k_pad), jnp.float32),
        grid_spec=pltpu.PrefetchScalarGridSpec(
            num_scalar_prefetch=0,
            grid=grid,
            in_specs=[
                # x: tiled over batch and HW chunk.
                pl.BlockSpec((tile_n, c, tile_hw), lambda i, j: (i, 0, j)),
                # weight / bias: constant index_map -> stay resident.
                pl.BlockSpec((c, k_pad), lambda i, j: (0, 0)),
                pl.BlockSpec((1, k_pad), lambda i, j: (0, 0)),
            ],
            out_specs=pl.BlockSpec((tile_n, k_pad), lambda i, j: (i, 0)),
            scratch_shapes=[pltpu.VMEM((tile_n, c), jnp.float32)],
        ),
        compiler_params=pltpu.CompilerParams(
            dimension_semantics=("parallel", "arbitrary"),
            vmem_limit_bytes=vmem_limit,
        ),
    )(x_r, w_p, bias)
    # Strip batch / class padding.
    return out[:n, :k]


if __name__ == "__main__":
    # Small shapes consistent with the module's forward (NCHW input).
    N, C, H, W = 2, 4, 16, 16
    NUM_CLASSES = 1000  # module default; internally padded to 1024

    key = jax.random.PRNGKey(0)
    kx, kw, kb = jax.random.split(key, 3)

    # Activation stream in bf16 (backbone-feature dtype).
    x = jax.random.normal(kx, (N, C, H, W), dtype=jnp.float32).astype(jnp.bfloat16)

    # Deterministic "frozen pretrained classifier" head parameters.
    w = jax.random.normal(kw, (C, NUM_CLASSES), dtype=jnp.float32) * 0.1
    b = jax.random.normal(kb, (NUM_CLASSES,), dtype=jnp.float32) * 0.01

    # `prime` is initialized to zeros, exactly as in Overfit.__init__.
    prime = jnp.zeros((NUM_CLASSES,), dtype=jnp.float32)

    # Frozen head packed once (outside the per-call path).
    w_p, b_p = pack_classifier(w, b)

    # Pure-JAX reference (same bf16 matmul operands, f32 GAP + accumulation).
    feats_ref = jnp.mean(x.astype(jnp.float32).reshape(N, C, H * W), axis=-1)
    y_ref = jnp.dot(feats_ref.astype(jnp.bfloat16), w.astype(jnp.bfloat16),
                    preferred_element_type=jnp.float32) + b + prime

    # Default tiling (single HW step at these toy shapes).
    y = jax.block_until_ready(overfit_forward(x, w_p, b_p, prime))
    assert y.shape == (N, NUM_CLASSES)
    assert jnp.allclose(y, y_ref, atol=2e-3, rtol=2e-3), float(jnp.abs(y - y_ref).max())

    # Exercise the multi-step HW reduction path (2 spatial chunks).
    y2 = jax.block_until_ready(overfit_forward(x, w_p, b_p, prime, tile_hw=128))
    assert jnp.allclose(y2, y_ref, atol=2e-3, rtol=2e-3), float(jnp.abs(y2 - y_ref).max())

    print("KERNEL_OK")
</pallas_src>

<mosaic_0001>
module attributes {stable_mosaic.version = 11 : i64} {
  func.func @_overfit_kernel(%arg0: i32, %arg1: i32, %arg2: memref<2x4x256xbf16, #tpu.memory_space<vmem>>, %arg3: memref<4x1024xbf16, #tpu.memory_space<vmem>>, %arg4: memref<1x1024xf32, #tpu.memory_space<vmem>>, %arg5: memref<2x1024xf32, #tpu.memory_space<vmem>>, %arg6: memref<2x4xf32, #tpu.memory_space<vmem>>) attributes {dimension_semantics = [#tpu.dimension_semantics<parallel>, #tpu.dimension_semantics<arbitrary>], iteration_bounds = array<i64: 1, 1>, scalar_prefetch = 0 : i64, scratch_operands = 1 : i64, tpu.core_type = #tpu.core_type<tc>, window_params = [{transform_indices = @transform_0, window_bounds = array<i64: 2, 4, 256>}, {pipeline_mode = #tpu.pipeline_mode<synchronous>, transform_indices = @transform_1, window_bounds = array<i64: 4, 1024>}, {pipeline_mode = #tpu.pipeline_mode<synchronous>, transform_indices = @transform_2, window_bounds = array<i64: 1, 1024>}, {transform_indices = @transform_3, window_bounds = array<i64: 2, 1024>}]} {
    %c0_i32 = arith.constant 0 : i32
    %0 = arith.cmpi eq, %arg1, %c0_i32 : i32
    %1 = arith.extui %0 : i1 to i32
    %c0_i32_0 = arith.constant 0 : i32
    %2 = arith.cmpi ne, %1, %c0_i32_0 : i32
    scf.if %2 {
      %cst_9 = arith.constant 0.000000e+00 : f32
      %12 = vector.broadcast %cst_9 : f32 to vector<2x4xf32>
      %c0_10 = arith.constant 0 : index
      %c0_11 = arith.constant 0 : index
      %13 = vector.load %arg6[%c0_10, %c0_11] : memref<2x4xf32, #tpu.memory_space<vmem>>, vector<2x4xf32>
      tpu.vector_store %arg6[%c0_10, %c0_11], %12 {strides = array<i32>} : memref<2x4xf32, #tpu.memory_space<vmem>>, vector<2x4xf32>,
    } else {
    }
    %c0 = arith.constant 0 : index
    %c0_1 = arith.constant 0 : index
    %3 = vector.load %arg6[%c0, %c0_1] : memref<2x4xf32, #tpu.memory_space<vmem>>, vector<2x4xf32>
    %c0_2 = arith.constant 0 : index
    %c0_3 = arith.constant 0 : index
    %c0_4 = arith.constant 0 : index
    %4 = vector.load %arg2[%c0_2, %c0_3, %c0_4] : memref<2x4x256xbf16, #tpu.memory_space<vmem>>, vector<2x4x256xbf16>
    %5 = arith.extf %4 : vector<2x4x256xbf16> to vector<2x4x256xf32>
    %cst = arith.constant dense<0.000000e+00> : vector<2x4xf32>
    %6 = vector.multi_reduction <add>, %5, %cst [2] : vector<2x4x256xf32> to vector<2x4xf32>
    %7 = arith.addf %3, %6 : vector<2x4xf32>
    %c0_5 = arith.constant 0 : index
    %c0_6 = arith.constant 0 : index
    %8 = vector.load %arg6[%c0_5, %c0_6] : memref<2x4xf32, #tpu.memory_space<vmem>>, vector<2x4xf32>
    tpu.vector_store %arg6[%c0_5, %c0_6], %7 {strides = array<i32>} : memref<2x4xf32, #tpu.memory_space<vmem>>, vector<2x4xf32>,
    %c0_i32_7 = arith.constant 0 : i32
    %9 = arith.cmpi eq, %arg1, %c0_i32_7 : i32
    %10 = arith.extui %9 : i1 to i32
    %c0_i32_8 = arith.constant 0 : i32
    %11 = arith.cmpi ne, %10, %c0_i32_8 : i32
    scf.if %11 {
      %c0_9 = arith.constant 0 : index
      %c0_10 = arith.constant 0 : index
      %12 = vector.load %arg6[%c0_9, %c0_10] : memref<2x4xf32, #tpu.memory_space<vmem>>, vector<2x4xf32>
      %cst_11 = arith.constant 3.906250e-03 : f32
      %13 = vector.broadcast %cst_11 : f32 to vector<2x4xf32>
      %14 = arith.mulf %12, %13 : vector<2x4xf32>
      %15 = arith.truncf %14 : vector<2x4xf32> to vector<2x4xbf16>
      %c0_12 = arith.constant 0 : index
      %c0_13 = arith.constant 0 : index
      %16 = vector.load %arg3[%c0_12, %c0_13] : memref<4x1024xbf16, #tpu.memory_space<vmem>>, vector<4x1024xbf16>
      %cst_14 = arith.constant dense<0.000000e+00> : vector<2x1024xf32>
      %17 = tpu.matmul %15, %16, %cst_14 {dimension_numbers = #tpu.dot_dimension_numbers<[1], [0], [0], [1], [0, 0, 1, 1], [], []>} : vector<2x4xbf16>, vector<4x1024xbf16>, vector<2x1024xf32> -> vector<2x1024xf32>
      %c0_15 = arith.constant 0 : index
      %c0_16 = arith.constant 0 : index
      %18 = vector.load %arg4[%c0_15, %c0_16] : memref<1x1024xf32, #tpu.memory_space<vmem>>, vector<1x1024xf32>
      %19 = vector.broadcast %18 : vector<1x1024xf32> to vector<2x1024xf32>
      %20 = arith.addf %17, %19 : vector<2x1024xf32>
      %c0_17 = arith.constant 0 : index
      %c0_18 = arith.constant 0 : index
      %21 = vector.load %arg5[%c0_17, %c0_18] : memref<2x1024xf32, #tpu.memory_space<vmem>>, vector<2x1024xf32>
      tpu.vector_store %arg5[%c0_17, %c0_18], %20 {strides = array<i32>} : memref<2x1024xf32, #tpu.memory_space<vmem>>, vector<2x1024xf32>,
    } else {
    }
    return
  }
  func.func @transform_0(%arg0: i32, %arg1: i32) -> (i32, i32, i32) {
    %c0_i32 = arith.constant 0 : i32
    %c0_i32_0 = arith.constant 0 : i32
    return %arg0, %c0_i32, %arg1 : i32, i32, i32
  }
  func.func @transform_1(%arg0: i32, %arg1: i32) -> (i32, i32) {
    %c0_i32 = arith.constant 0 : i32
    %c0_i32_0 = arith.constant 0 : i32
    %c0_i32_1 = arith.constant 0 : i32
    return %c0_i32, %c0_i32_0 : i32, i32
  }
  func.func @transform_2(%arg0: i32, %arg1: i32) -> (i32, i32) {
    %c0_i32 = arith.constant 0 : i32
    %c0_i32_0 = arith.constant 0 : i32
    %c0_i32_1 = arith.constant 0 : i32
    return %c0_i32, %c0_i32_0 : i32, i32
  }
  func.func @transform_3(%arg0: i32, %arg1: i32) -> (i32, i32) {
    %c0_i32 = arith.constant 0 : i32
    %c0_i32_0 = arith.constant 0 : i32
    return %arg0, %c0_i32 : i32, i32
  }
}

</mosaic_0001>

<llo_original>
// kernel: tpu_custom_call.1
$region0: #{tpu_custom_call.1}
  #allocation0 [shape = 'u32[]', space=smem, size = 0x4, offset = 0x4, fixed_abs, tag = 'smem constant byte address 0x4 - core index']
  #allocation1 [shape = 'u32[144,128]{1,0:T(1,128)}', space=vmem, size = 0x12000, scoped, tag = 'internal scratch']
  #allocation2 [shape = 'f32[2,4]{1,0:T(2,128)}', space=vmem, size = 0x400, scoped, tag = 'scratch operand']
  %s0 = inlined_call_operand.hbm [shape: bf16[2,4,256], index: 0, kind: input, shape index: {}]
  %s1 = inlined_call_operand.hbm [shape: bf16[4,1024], index: 1, kind: input, shape index: {}]
  %s2 = inlined_call_operand.hbm [shape: f32[1,1024], index: 2, kind: input, shape index: {}]
  %s3 = inlined_call_operand.hbm [shape: f32[2,1024], index: 3, kind: output, shape index: {}]
  %s4 = sld [smem:[#allocation0]]
  $region42: #{tpu_custom_call.1} parent=0
    _
  %s6 = ssub.s32 1, %s4
  %s7 = scalar_select 0, %s6, %s4
  $region1: #{tpu_custom_call.1} parent=0
    #allocation3 [shape = 'u8[4096]{0}', space=vmem, size = 0x1000, scoped, tag = 'input window, operand 0, single buffered']
    #allocation4 [shape = 's32[1]{0}', space=sflag, size = 0x4, scoped, tag = 'scoped memory for tpu_custom_call.1']
    #allocation5 [shape = 's32[1]{0}', space=sflag, size = 0x4, scoped, tag = 'scoped memory for tpu_custom_call.1']
    #allocation6 [shape = 'u8[8192]{0}', space=vmem, size = 0x2000, scoped, tag = 'input window, operand 1, single buffered']
    #allocation7 [shape = 's32[1]{0}', space=sflag, size = 0x4, scoped, tag = 'scoped memory for tpu_custom_call.1']
    #allocation8 [shape = 'u8[4096]{0}', space=vmem, size = 0x1000, scoped, tag = 'input window, operand 2, single buffered']
    #allocation9 [shape = 'u8[8192]{0}', space=vmem, size = 0x2000, scoped, tag = 'output window, operand 0, single buffered']
    %8 = vsyncpa [#allocation4], 0
    %9 = vsyncpa [#allocation7], 0
    %10 = vsyncpa [#allocation5], 0
    // Predicated region
    $region2: #{tpu_custom_call.1} parent=1 // pred_check
      _
    $region3: #{tpu_custom_call.1} parent=1 // pred_check_branch
      %12 = sbr.rel (0) target = $region5
    $region4: #{tpu_custom_call.1} parent=1 // pred_region
      %s14 = ssub.s32 128, 128
      %15 = vsyncadd [#allocation4], %s14
      %s16 = sshll.u32 [#allocation3], 4
      %s17 = int_to_ptr.vmem [resolvable:$true] %s16
      %22 = dma.hbm_to_vmem [thread:$0]  %s0, 128, %s17, [#allocation4], 64, 64, 4
    $region5: #{tpu_custom_call.1} parent=1 // pred_fallthru
      _
    // Predicated region
    $region6: #{tpu_custom_call.1} parent=1 // pred_check
      _
    $region7: #{tpu_custom_call.1} parent=1 // pred_check_branch
      %24 = sbr.rel (0) target = $region9
    $region8: #{tpu_custom_call.1} parent=1 // pred_region
      %s26 = ssub.s32 256, 256
      %27 = vsyncadd [#allocation7], %s26
      %s29 = sshll.u32 [#allocation6], 4
      %s30 = int_to_ptr.vmem [resolvable:$true] %s29
      %32 = dma.hbm_to_vmem [thread:$0]  %s1, 256, %s30, [#allocation7]
    $region9: #{tpu_custom_call.1} parent=1 // pred_fallthru
      _
    // Predicated region
    $region10: #{tpu_custom_call.1} parent=1 // pred_check
      _
    $region11: #{tpu_custom_call.1} parent=1 // pred_check_branch
      %34 = sbr.rel (0) target = $region13
    $region12: #{tpu_custom_call.1} parent=1 // pred_region
      %s36 = ssub.s32 128, 128
      %37 = vsyncadd [#allocation7], %s36
      %s39 = sshll.u32 [#allocation8], 4
      %s40 = int_to_ptr.vmem [resolvable:$true] %s39
      %42 = dma.hbm_to_vmem [thread:$0]  %s2, 128, %s40, [#allocation7]
    $region13: #{tpu_custom_call.1} parent=1 // pred_fallthru
      _
    // Predicated region
    $region14: #{tpu_custom_call.1} parent=1 // pred_check
      _
    $region15: #{tpu_custom_call.1} parent=1 // pred_check_branch
      %44 = sbr.rel (0) target = $region17
    $region16: #{tpu_custom_call.1} parent=1 // pred_region
      %45 = dma.done [#allocation4], 128
    $region17: #{tpu_custom_call.1} parent=1 // pred_fallthru
      _
    // Predicated region
    $region18: #{tpu_custom_call.1} parent=1 // pred_check
      _
    $region19: #{tpu_custom_call.1} parent=1 // pred_check_branch
      %47 = sbr.rel (0) target = $region21
    $region20: #{tpu_custom_call.1} parent=1 // pred_region
      %48 = dma.done [#allocation7], 256
    $region21: #{tpu_custom_call.1} parent=1 // pred_fallthru
      _
    // Predicated region
    $region22: #{tpu_custom_call.1} parent=1 // pred_check
      _
    $region23: #{tpu_custom_call.1} parent=1 // pred_check_branch
      %50 = sbr.rel (0) target = $region25
    $region24: #{tpu_custom_call.1} parent=1 // pred_region
      %51 = dma.done [#allocation7], 128
    $region25: #{tpu_custom_call.1} parent=1 // pred_fallthru
      _
    %p53 = scmp.eq.s32.totalorder 0, 0
    // Predicated region
    $region26: #{tpu_custom_call.1} parent=1 // pred_check
      %p54 = pneg %p53
    $region27: #{tpu_custom_call.1} parent=1 // pred_check_branch
      %56 = sbr.rel (%p54) target = $region29
    $region28: #{tpu_custom_call.1} parent=1 // pred_region
      %vm57 = vcmask 25600
      %58 = vst.msk [vmem:[#allocation2] sm:$0x3] %vm57, 0.0
    $region29: #{tpu_custom_call.1} parent=1 // pred_fallthru
      _
    %v59 = vld [vmem:[#allocation2] sm:$0x3]
    %v60 = vld [vmem:[#allocation3] sm:$0xf]
    %v61 = vld [vmem:[#allocation3 + $0x4] sm:$0xf]
    %v62 = vunpack.c.l.bf16 %v60
    %v63 = vunpack.c.l.bf16 %v61
    %v66 = vcombine.high %v62, %v62
    %v67 = vcombine.high %v63, %v63
    %vm70 = vcmask 1043456
    %v71 = vsel %vm70, %v62, 0.0
    %v72 = vsel %vm70, %v66, 0.0
    %v73 = vadd.f32 %v71, %v72
    %74 = vadd.xlane.f32.xlu0 %v73
    %v75 = vpop.xlane.xlu0 %74
    %v76 = vsel %vm70, %v63, 0.0
    %v77 = vsel %vm70, %v67, 0.0
    %v78 = vadd.f32 %v76, %v77
    %79 = vadd.xlane.f32.xlu0 %v78
    %v80 = vpop.xlane.xlu0 %79
    %v83 = vlaneseq
    %v84 = vand.u32 %v83, 127
    %v85 = vlaneseq
    %v86 = vshrl.u32 %v85, 7
    %v87 = vsub.s32 %v84, %v86
    %v88 = vrot.slane %v75, %v87
    %v89 = vlaneseq
    %v90 = vshrl.u32 %v89, 7
    %v91 = vsub.s32 %v84, %v90
    %v92 = vrot.slane %v80, %v91
    %vm93 = vcmask 1041409
    %v94 = vsel %vm93, %v92, %v88
    %v96 = vadd.f32 %v59, %v94
    %vm97 = vcmask 25600
    %98 = vst.msk [vmem:[#allocation2] sm:$0x3] %vm97, %v96
    // Predicated region
    $region30: #{tpu_custom_call.1} parent=1 // pred_check
      %p99 = pneg %p53
    $region31: #{tpu_custom_call.1} parent=1 // pred_check_branch
      %101 = sbr.rel (%p99) target = $region33
    $region32: #{tpu_custom_call.1} parent=1 // pred_region
      %v102 = vld [vmem:[#allocation2] sm:$0x3]
      %v103 = vmul.f32 %v102, 0.00390625
      %v104 = vpack.c.bf16 %v103, %v103
      %v105 = vld [vmem:[#allocation6] sm:$0xff]
      %v106 = vld [vmem:[#allocation6 + $0x8] sm:$0xff]
      %v107 = vld [vmem:[#allocation8] sm:$0xff]
      %v109 = vlaneseq
      %v110 = vshrl.u32 %v109, 7
      %v111 = vsub.s32 0, %v110
      %v112 = vrot.slane %v107, %v111
      %v113 = vlaneseq
      %v114 = vshrl.u32 %v113, 7
      %v115 = vsub.s32 1, %v114
      %v116 = vrot.slane %v107, %v115
      %v117 = vlaneseq
      %v118 = vshrl.u32 %v117, 7
      %v119 = vsub.s32 2, %v118
      %v120 = vrot.slane %v107, %v119
      %v121 = vlaneseq
      %v122 = vshrl.u32 %v121, 7
      %v123 = vsub.s32 3, %v122
      %v124 = vrot.slane %v107, %v123
      %v125 = vlaneseq
      %v126 = vshrl.u32 %v125, 7
      %v127 = vsub.s32 4, %v126
      %v128 = vrot.slane %v107, %v127
      %v129 = vlaneseq
      %v130 = vshrl.u32 %v129, 7
      %v131 = vsub.s32 5, %v130
      %v132 = vrot.slane %v107, %v131
      %v133 = vlaneseq
      %v134 = vshrl.u32 %v133, 7
      %v135 = vsub.s32 6, %v134
      %v136 = vrot.slane %v107, %v135
      %v137 = vlaneseq
      %v138 = vshrl.u32 %v137, 7
      %v139 = vsub.s32 7, %v138
      %v140 = vrot.slane %v107, %v139
      %v151 = vcombine.high %v105, %v105
      %v153 = vunpack.c.l.s4 1983009808
      %v154 = vunpack.c.0.s8 %v153
      %v155 = vlaneseq
      %v156 = vshrl.u32 %v155, 7
      %v157 = vsub.s32 %v154, %v156
      %v158 = vrot.slane %v105, %v157
      %v160 = vunpack.c.l.s4 1983009808
      %v161 = vunpack.c.0.s8 %v160
      %v162 = vlaneseq
      %v163 = vshrl.u32 %v162, 7
      %v164 = vsub.s32 %v161, %v163
      %v165 = vrot.slane %v151, %v164
      %v166 = vcombine.high %v158, %v158
      %v167 = vcombine.high %v165, %v165
      %v168 = vcombine.high %v106, %v106
      %v170 = vunpack.c.l.s4 1983009808
      %v171 = vunpack.c.0.s8 %v170
      %v172 = vlaneseq
      %v173 = vshrl.u32 %v172, 7
      %v174 = vsub.s32 %v171, %v173
      %v175 = vrot.slane %v106, %v174
      %v177 = vunpack.c.l.s4 1983009808
      %v178 = vunpack.c.0.s8 %v177
      %v179 = vlaneseq
      %v180 = vshrl.u32 %v179, 7
      %v181 = vsub.s32 %v178, %v180
      %v182 = vrot.slane %v168, %v181
      %v183 = vcombine.high %v175, %v175
      %v184 = vcombine.high %v182, %v182
      %vm185 = vcmask 31744
      %v187 = vsel %vm185, %v104, 0
      %vm189 = vcmask 1041408
      %v191 = vsel %vm189, %v158, 0
      %v194 = vsel %vm189, %v166, 0
      %v197 = vsel %vm189, %v165, 0
      %v200 = vsel %vm189, %v167, 0
      %v203 = vsel %vm189, %v175, 0
      %v206 = vsel %vm189, %v183, 0
      %v209 = vsel %vm189, %v182, 0
      %v212 = vsel %vm189, %v184, 0
      %214 = vmatprep.subr.bf16.mxu0 %v194
      %215 = vmatpush1.bf16.msra.mxu0 %v191
      %216 = vmatprep.subr.bf16.mxu0 0
      %217 = vmatpush1.bf16.msra.mxu0 0
      %218 = vmatprep.subr.bf16.mxu0 0
      %219 = vmatpush1.bf16.msra.mxu0 0
      %220 = vmatprep.subr.bf16.mxu0 0
      %221 = vmatpush1.bf16.msra.mxu0 0
      %222 = vmatprep.subr.bf16.mxu0 0
      %223 = vmatpush1.bf16.msra.mxu0 0
      %224 = vmatprep.subr.bf16.mxu0 0
      %225 = vmatpush1.bf16.msra.mxu0 0
      %226 = vmatprep.subr.bf16.mxu0 0
      %227 = vmatpush1.bf16.msra.mxu0 0
      %228 = vmatprep.subr.bf16.mxu0 0
      %229 = vmatpush1.bf16.msra.mxu0 0
      %230 = vmatprep.subr.bf16.mxu0 0
      %231 = vmatpush1.bf16.msra.mxu0 0
      %232 = vmatprep.subr.bf16.mxu0 0
      %233 = vmatpush1.bf16.msra.mxu0 0
      %234 = vmatprep.subr.bf16.mxu0 0
      %235 = vmatpush1.bf16.msra.mxu0 0
      %236 = vmatprep.subr.bf16.mxu0 0
      %237 = vmatpush1.bf16.msra.mxu0 0
      %238 = vmatprep.subr.bf16.mxu0 0
      %239 = vmatpush1.bf16.msra.mxu0 0
      %240 = vmatprep.subr.bf16.mxu0 0
      %241 = vmatpush1.bf16.msra.mxu0 0
      %242 = vmatprep.subr.bf16.mxu0 0
      %243 = vmatpush1.bf16.msra.mxu0 0
      %244 = vmatprep.subr.bf16.mxu0 0
      %245 = vmatpush1.bf16.msra.mxu0 0
      %246 = vmatprep.mubr.bf16.mxu0 0
      %247 = vmatmul.mubr.bf16.gmra.mrb[0].mxu0 %v187
      %v248 = vpop.f32.mrb[0].mxu0
      %v249 = vadd.f32 %v112, %v248
      %v250 = vpop.f32.mrb[0].mxu0
      %v251 = vadd.f32 %v116, %v250
      %v252 = vpop.f32.mrb[0].mxu0
      %v253 = vpop.f32.mrb[0].mxu0
      %254 = vdwg.mxu0
      %255 = vmatprep.subr.bf16.mxu0 %v200
      %256 = vmatpush1.bf16.msra.mxu0 %v197
      %257 = vmatprep.subr.bf16.mxu0 0
      %258 = vmatpush1.bf16.msra.mxu0 0
      %259 = vmatprep.subr.bf16.mxu0 0
      %260 = vmatpush1.bf16.msra.mxu0 0
      %261 = vmatprep.subr.bf16.mxu0 0
      %262 = vmatpush1.bf16.msra.mxu0 0
      %263 = vmatprep.subr.bf16.mxu0 0
      %264 = vmatpush1.bf16.msra.mxu0 0
      %265 = vmatprep.subr.bf16.mxu0 0
      %266 = vmatpush1.bf16.msra.mxu0 0
      %267 = vmatprep.subr.bf16.mxu0 0
      %268 = vmatpush1.bf16.msra.mxu0 0
      %269 = vmatprep.subr.bf16.mxu0 0
      %270 = vmatpush1.bf16.msra.mxu0 0
      %271 = vmatprep.subr.bf16.mxu0 0
      %272 = vmatpush1.bf16.msra.mxu0 0
      %273 = vmatprep.subr.bf16.mxu0 0
      %274 = vmatpush1.bf16.msra.mxu0 0
      %275 = vmatprep.subr.bf16.mxu0 0
      %276 = vmatpush1.bf16.msra.mxu0 0
      %277 = vmatprep.subr.bf16.mxu0 0
      %278 = vmatpush1.bf16.msra.mxu0 0
      %279 = vmatprep.subr.bf16.mxu0 0
      %280 = vmatpush1.bf16.msra.mxu0 0
      %281 = vmatprep.subr.bf16.mxu0 0
      %282 = vmatpush1.bf16.msra.mxu0 0
      %283 = vmatprep.subr.bf16.mxu0 0
      %284 = vmatpush1.bf16.msra.mxu0 0
      %285 = vmatprep.subr.bf16.mxu0 0
      %286 = vmatpush1.bf16.msra.mxu0 0
      %287 = vmatprep.mubr.bf16.mxu0 0
      %288 = vmatmul.mubr.bf16.gmra.mrb[0].mxu0 %v187
      %v289 = vpop.f32.mrb[0].mxu0
      %v290 = vadd.f32 %v120, %v289
      %v291 = vpop.f32.mrb[0].mxu0
      %v292 = vadd.f32 %v124, %v291
      %v293 = vpop.f32.mrb[0].mxu0
      %v294 = vpop.f32.mrb[0].mxu0
      %295 = vdwg.mxu0
      %296 = vmatprep.subr.bf16.mxu0 %v206
      %297 = vmatpush1.bf16.msra.mxu0 %v203
      %298 = vmatprep.subr.bf16.mxu0 0
      %299 = vmatpush1.bf16.msra.mxu0 0
      %300 = vmatprep.subr.bf16.mxu0 0
      %301 = vmatpush1.bf16.msra.mxu0 0
      %302 = vmatprep.subr.bf16.mxu0 0
      %303 = vmatpush1.bf16.msra.mxu0 0
      %304 = vmatprep.subr.bf16.mxu0 0
      %305 = vmatpush1.bf16.msra.mxu0 0
      %306 = vmatprep.subr.bf16.mxu0 0
      %307 = vmatpush1.bf16.msra.mxu0 0
      %308 = vmatprep.subr.bf16.mxu0 0
      %309 = vmatpush1.bf16.msra.mxu0 0
      %310 = vmatprep.subr.bf16.mxu0 0
      %311 = vmatpush1.bf16.msra.mxu0 0
      %312 = vmatprep.subr.bf16.mxu0 0
      %313 = vmatpush1.bf16.msra.mxu0 0
      %314 = vmatprep.subr.bf16.mxu0 0
      %315 = vmatpush1.bf16.msra.mxu0 0
      %316 = vmatprep.subr.bf16.mxu0 0
      %317 = vmatpush1.bf16.msra.mxu0 0
      %318 = vmatprep.subr.bf16.mxu0 0
      %319 = vmatpush1.bf16.msra.mxu0 0
      %320 = vmatprep.subr.bf16.mxu0 0
      %321 = vmatpush1.bf16.msra.mxu0 0
      %322 = vmatprep.subr.bf16.mxu0 0
      %323 = vmatpush1.bf16.msra.mxu0 0
      %324 = vmatprep.subr.bf16.mxu0 0
      %325 = vmatpush1.bf16.msra.mxu0 0
      %326 = vmatprep.subr.bf16.mxu0 0
      %327 = vmatpush1.bf16.msra.mxu0 0
      %328 = vmatprep.mubr.bf16.mxu0 0
      %329 = vmatmul.mubr.bf16.gmra.mrb[0].mxu0 %v187
      %v330 = vpop.f32.mrb[0].mxu0
      %v331 = vadd.f32 %v128, %v330
      %v332 = vpop.f32.mrb[0].mxu0
      %v333 = vadd.f32 %v132, %v332
      %v334 = vpop.f32.mrb[0].mxu0
      %v335 = vpop.f32.mrb[0].mxu0
      %336 = vdwg.mxu0
      %337 = vmatprep.subr.bf16.mxu0 %v212
      %338 = vmatpush1.bf16.msra.mxu0 %v209
      %339 = vmatprep.subr.bf16.mxu0 0
      %340 = vmatpush1.bf16.msra.mxu0 0
      %341 = vmatprep.subr.bf16.mxu0 0
      %342 = vmatpush1.bf16.msra.mxu0 0
      %343 = vmatprep.subr.bf16.mxu0 0
      %344 = vmatpush1.bf16.msra.mxu0 0
      %345 = vmatprep.subr.bf16.mxu0 0
      %346 = vmatpush1.bf16.msra.mxu0 0
      %347 = vmatprep.subr.bf16.mxu0 0
      %348 = vmatpush1.bf16.msra.mxu0 0
      %349 = vmatprep.subr.bf16.mxu0 0
      %350 = vmatpush1.bf16.msra.mxu0 0
      %351 = vmatprep.subr.bf16.mxu0 0
      %352 = vmatpush1.bf16.msra.mxu0 0
      %353 = vmatprep.subr.bf16.mxu0 0
      %354 = vmatpush1.bf16.msra.mxu0 0
      %355 = vmatprep.subr.bf16.mxu0 0
      %356 = vmatpush1.bf16.msra.mxu0 0
      %357 = vmatprep.subr.bf16.mxu0 0
      %358 = vmatpush1.bf16.msra.mxu0 0
      %359 = vmatprep.subr.bf16.mxu0 0
      %360 = vmatpush1.bf16.msra.mxu0 0
      %361 = vmatprep.subr.bf16.mxu0 0
      %362 = vmatpush1.bf16.msra.mxu0 0
      %363 = vmatprep.subr.bf16.mxu0 0
      %364 = vmatpush1.bf16.msra.mxu0 0
      %365 = vmatprep.subr.bf16.mxu0 0
      %366 = vmatpush1.bf16.msra.mxu0 0
      %367 = vmatprep.subr.bf16.mxu0 0
      %368 = vmatpush1.bf16.msra.mxu0 0
      %369 = vmatprep.mubr.bf16.mxu0 0
      %370 = vmatmul.mubr.bf16.gmra.mrb[0].mxu0 %v187
      %v371 = vpop.f32.mrb[0].mxu0
      %v372 = vadd.f32 %v136, %v371
      %v373 = vpop.f32.mrb[0].mxu0
      %v374 = vadd.f32 %v140, %v373
      %v375 = vpop.f32.mrb[0].mxu0
      %v376 = vpop.f32.mrb[0].mxu0
      %377 = vdwg.mxu0
      %v386 = vcombine.low %v249, %v251
      %v387 = vcombine.low %v290, %v292
      %v389 = vunpack.c.l.s4 1983009808
      %v390 = vunpack.c.0.s8 %v389
      %v391 = vlaneseq
      %v392 = vshrl.u32 %v391, 7
      %v393 = vsub.s32 %v390, %v392
      %v394 = vrot.slane %v386, %v393
      %v396 = vunpack.c.l.s4 1983009808
      %v397 = vunpack.c.0.s8 %v396
      %v398 = vlaneseq
      %v399 = vshrl.u32 %v398, 7
      %v400 = vsub.s32 %v397, %v399
      %v401 = vrot.slane %v387, %v400
      %v402 = vcombine.low %v394, %v401
      %v403 = vcombine.low %v331, %v333
      %v404 = vcombine.low %v372, %v374
      %v406 = vunpack.c.l.s4 1983009808
      %v407 = vunpack.c.0.s8 %v406
      %v408 = vlaneseq
      %v409 = vshrl.u32 %v408, 7
      %v410 = vsub.s32 %v407, %v409
      %v411 = vrot.slane %v403, %v410
      %v413 = vunpack.c.l.s4 1983009808
      %v414 = vunpack.c.0.s8 %v413
      %v415 = vlaneseq
      %v416 = vshrl.u32 %v415, 7
      %v417 = vsub.s32 %v414, %v416
      %v418 = vrot.slane %v404, %v417
      %v419 = vcombine.low %v411, %v418
      %422 = vst [vmem:[#allocation9] sm:$0xff] %v402
      %423 = vst [vmem:[#allocation9 + $0x8] sm:$0xff] %v419
    $region33: #{tpu_custom_call.1} parent=1 // pred_fallthru
      _
    // Predicated region
    $region34: #{tpu_custom_call.1} parent=1 // pred_check
      _
    $region35: #{tpu_custom_call.1} parent=1 // pred_check_branch
      %425 = sbr.rel (0) target = $region37
    $region36: #{tpu_custom_call.1} parent=1 // pred_region
      %s427 = ssub.s32 256, 256
      %428 = vsyncadd [#allocation5], %s427
      %s430 = sshll.u32 [#allocation9], 4
      %s431 = int_to_ptr.vmem [resolvable:$true] %s430
      %433 = dma.vmem_to_hbm [thread:$0]  %s431, 256, %s3, [#allocation5]
    $region37: #{tpu_custom_call.1} parent=1 // pred_fallthru
      _
    // Predicated region
    $region38: #{tpu_custom_call.1} parent=1 // pred_check
      _
    $region39: #{tpu_custom_call.1} parent=1 // pred_check_branch
      %435 = sbr.rel (0) target = $region41
    $region40: #{tpu_custom_call.1} parent=1 // pred_region
      %436 = dma.done [#allocation5], 256
    $region41: #{tpu_custom_call.1} parent=1 // pred_fallthru
      _
    %437 = vsyncpa [#allocation4], 1
    %438 = vsyncpa [#allocation7], 1
    %439 = vsyncpa [#allocation5], 1

</llo_original>
